<compile_context>
chip_gen: v7x
topology: tpu7x:2x2x1
jax: 0.10.0
libtpu: 0.0.40
codegen_flags: <defaults>
</compile_context>

<pallas_src>
import functools

import jax
import jax.numpy as jnp
from jax import lax
from jax.experimental import pallas as pl
from jax.experimental.pallas import tpu as pltpu


def _caption_loss_kernel(logits_ref, labels_ref, out_ref, m_sc, s_sc, lx_sc,
                         *, pad_id, seq_len, vocab_size, mask_v):
    # logits_ref: (1, tV, tT) native dtype     labels_ref: (1, 1, tT) int32
    # out_ref:    (1, 8, 128) f32, resident across the (t, v) grid axes
    #             [0,0,0] = sum of per-token losses   [0,0,1] = #correct
    #             [0,0,2] = #non-pad tokens
    # m_sc/s_sc/lx_sc: (1, tT) f32 online-softmax state, resident across v.
    t = pl.program_id(1)
    v = pl.program_id(2)
    num_v = pl.num_programs(2)

    @pl.when((t == 0) & (v == 0))
    def _init_out():
        out_ref[...] = jnp.zeros_like(out_ref)

    @pl.when(v == 0)
    def _init_state():
        m_sc[...] = jnp.full(m_sc.shape, -jnp.inf, dtype=jnp.float32)
        s_sc[...] = jnp.zeros(s_sc.shape, dtype=jnp.float32)
        lx_sc[...] = jnp.zeros(lx_sc.shape, dtype=jnp.float32)

    x = logits_ref[0]                     # (tV, tT) native dtype (bf16 stays bf16)
    lab = labels_ref[0]                   # (1, tT) int32
    tV, tT = x.shape

    row = lax.broadcasted_iota(jnp.int32, (tV, tT), 0)      # sublane (vocab) index
    if mask_v:
        # ragged last V chunk: OOB sublanes hold unspecified data
        x = jnp.where(v * tV + row < vocab_size, x, -jnp.inf)

    # ---- online-LSE update (state kept in f32) ----
    chunk_max = jnp.max(x, axis=0, keepdims=True).astype(jnp.float32)   # (1, tT)
    m_old = m_sc[...]
    m_new = jnp.maximum(m_old, chunk_max)
    d = x - m_new.astype(x.dtype)                                        # (tV, tT)
    e = jnp.exp(d)                                                       # EUP

    # label-logit gather: the label row lives in exactly one V chunk
    onehot = row == (lab - v * tV)                                       # (tV, tT)
    lab_x = jnp.where(onehot, x, 0)                                      # (tV, tT)

    # sublane reductions on the (idle) MXU when the tile is 128-aligned
    if tV % 128 == 0:
        ones_row = jnp.ones((1, tV), dtype=x.dtype)
        s_chunk = jnp.dot(ones_row, e, preferred_element_type=jnp.float32)
        lx_chunk = jnp.dot(ones_row, lab_x, preferred_element_type=jnp.float32)
    else:
        s_chunk = jnp.sum(e, axis=0, keepdims=True).astype(jnp.float32)
        lx_chunk = jnp.sum(lab_x, axis=0, keepdims=True).astype(jnp.float32)

    alpha = jnp.exp(m_old - m_new)        # exp(-inf) = 0 at v == 0
    s_sc[...] = alpha * s_sc[...] + s_chunk
    lx_sc[...] = lx_sc[...] + lx_chunk
    m_sc[...] = m_new

    # ---- finalize once per (b, t) tile ----
    @pl.when(v == num_v - 1)
    def _finalize():
        pos = t * tT + lax.broadcasted_iota(jnp.int32, (1, tT), 1)       # (1, tT)
        nopad = (lab != pad_id) & (pos < seq_len)                        # (1, tT)

        m_f = m_sc[...]
        lse = m_f + jnp.log(s_sc[...])
        # cross entropy with ignore_index=pad_id, reduction='none'
        loss_t = jnp.where(nopad, lse - lx_sc[...], 0.0)
        # argmax(logits) == label  <=>  label logit equals the global max
        correct_t = jnp.where(nopad & (lx_sc[...] >= m_f), 1.0, 0.0)

        loss_sum = jnp.sum(loss_t, axis=1, keepdims=True)                # (1, 1)
        correct_sum = jnp.sum(correct_t, axis=1, keepdims=True)          # (1, 1)
        nopad_sum = jnp.sum(nopad.astype(jnp.float32), axis=1, keepdims=True)

        # lane-dense (8, 128) accumulator slab, written only once per t tile
        sub = lax.broadcasted_iota(jnp.int32, (8, 128), 0)
        lane = lax.broadcasted_iota(jnp.int32, (8, 128), 1)
        contrib = (jnp.where((sub == 0) & (lane == 0), loss_sum, 0.0)
                   + jnp.where((sub == 0) & (lane == 1), correct_sum, 0.0)
                   + jnp.where((sub == 0) & (lane == 2), nopad_sum, 0.0))
        out_ref[0] += contrib


def caption_loss(logits_bvt, labels, pad_id=0, *, tv=None,
                 vmem_limit_bytes=48 * 1024 * 1024):
    """logits_bvt: (B, V, T) float (native PyTorch layout, consumed as-is);
    labels: (B, T) int."""
    B, V, T = logits_bvt.shape
    labels3 = labels.astype(jnp.int32).reshape(B, 1, T)

    # T tile on the lane axis (full T if small, else 128); ragged tail masked
    # in-kernel — no host-side padding pass over the logits.
    tT = T if T < 128 else 128
    num_t = pl.cdiv(T, tT)

    # V tile: full V when small, otherwise sized for ~2 MB DMA blocks
    # (double-buffered logits + a few (tV, tT) temps stay well under the
    # 48 MB scoped-VMEM request on every generation, incl. v7x's 64 MiB).
    if tv is None:
        if V <= 4096:
            tV = V
        else:
            itemsize = jnp.dtype(logits_bvt.dtype).itemsize
            target = 2 << 20
            tV = max(1024, min(8192, target // (tT * itemsize)))
            tV = (tV // 512) * 512
    else:
        tV = tv
    tV = min(tV, V)
    if tV != V:
        assert tV % 8 == 0, "partial V tiles must be sublane-aligned"
    num_v = pl.cdiv(V, tV)
    mask_v = (V % tV) != 0

    kernel = functools.partial(_caption_loss_kernel, pad_id=pad_id,
                               seq_len=T, vocab_size=V, mask_v=mask_v)
    sums = pl.pallas_call(
        kernel,
        out_shape=jax.ShapeDtypeStruct((B, 8, 128), jnp.float32),
        grid=(B, num_t, num_v),
        in_specs=[
            pl.BlockSpec((1, tV, tT), lambda b, t, v: (b, v, t)),
            # labels block does not depend on v -> stays resident across the V loop
            pl.BlockSpec((1, 1, tT), lambda b, t, v: (b, 0, t)),
        ],
        out_specs=pl.BlockSpec((1, 8, 128), lambda b, t, v: (b, 0, 0)),
        scratch_shapes=[
            pltpu.VMEM((1, tT), jnp.float32),   # running max m
            pltpu.VMEM((1, tT), jnp.float32),   # running exp-sum s
            pltpu.VMEM((1, tT), jnp.float32),   # label logit lx
        ],
        compiler_params=pltpu.CompilerParams(
            dimension_semantics=("parallel", "arbitrary", "arbitrary"),
            vmem_limit_bytes=vmem_limit_bytes),
    )(logits_bvt, labels3)

    loss_sum_rows = sums[:, 0, 0]   # (B,)
    correct_rows = sums[:, 0, 1]    # (B,)
    nopad_rows = sums[:, 0, 2]      # (B,)

    # scalar glue over (B,)-sized arrays (matches the torch.no_grad bookkeeping)
    # NOTE: matches the PyTorch module exactly: reduction='none' then .mean()
    # divides by B*T (pads contribute 0), NOT by the non-pad count.
    mean_loss = loss_sum_rows.sum() / (B * T)
    total = nopad_rows.sum()
    acc = 100.0 * correct_rows.sum() / (total + 1e-8)
    # NOTE: a fully-padded row gives inf/NaN here, same as the PyTorch module.
    ppls = jnp.exp(loss_sum_rows / nopad_rows)   # per-sample perplexity

    return {
        "loss": mean_loss,
        "caption_loss": mean_loss,
        "caption_acc": acc,
        "ppl": ppls.mean(),
    }


if __name__ == "__main__":
    key = jax.random.PRNGKey(0)
    k_logits, k_labels = jax.random.split(key)

    # Small shapes that exercise: multi-chunk online-LSE over V (tv=128),
    # ragged V tail (200 % 128 != 0), T tiling and ragged T tail (130 % 128).
    B, V, T = 2, 200, 130
    pad_id = 0  # tokenizer.pad_token_id (deterministic stand-in)

    logits = jax.random.normal(k_logits, (B, V, T), dtype=jnp.float32)
    labels = jax.random.randint(k_labels, (B, T), 1, V, dtype=jnp.int32)
    # pad out the tails of each sequence
    labels = labels.at[0, 100:].set(pad_id)
    labels = labels.at[1, 90:].set(pad_id)

    out = caption_loss(logits, labels, pad_id=pad_id, tv=128)
    out = jax.tree_util.tree_map(jax.block_until_ready, out)

    # pure-JAX reference check
    logp = jax.nn.log_softmax(jnp.transpose(logits, (0, 2, 1)), axis=-1)   # (B, T, V)
    ll = jnp.take_along_axis(logp, labels[..., None], axis=-1)[..., 0]     # (B, T)
    nopad = labels != pad_id
    ref_loss = jnp.where(nopad, -ll, 0.0)
    pred = jnp.argmax(jnp.transpose(logits, (0, 2, 1)), axis=-1)
    ref_acc = 100.0 * ((pred == labels) & nopad).sum() / (nopad.sum() + 1e-8)
    ref_ppl = jnp.exp(ref_loss.sum(axis=1) / nopad.sum(axis=1)).mean()

    assert jnp.allclose(out["loss"], ref_loss.mean(), atol=1e-5, rtol=1e-5)
    assert jnp.allclose(out["caption_loss"], ref_loss.mean(), atol=1e-5, rtol=1e-5)
    assert jnp.allclose(out["caption_acc"], ref_acc, atol=1e-4, rtol=1e-5)
    assert jnp.allclose(out["ppl"], ref_ppl, atol=1e-3, rtol=1e-4)

    print("KERNEL_OK")
</pallas_src>

<mosaic_0001>
module attributes {stable_mosaic.version = 11 : i64} {
  func.func @_caption_loss_kernel(%arg0: i32, %arg1: i32, %arg2: i32, %arg3: memref<1x128x128xf32, #tpu.memory_space<vmem>>, %arg4: memref<1x1x128xi32, #tpu.memory_space<vmem>>, %arg5: memref<1x8x128xf32, #tpu.memory_space<vmem>>, %arg6: memref<1x128xf32, #tpu.memory_space<vmem>>, %arg7: memref<1x128xf32, #tpu.memory_space<vmem>>, %arg8: memref<1x128xf32, #tpu.memory_space<vmem>>) attributes {dimension_semantics = [#tpu.dimension_semantics<parallel>, #tpu.dimension_semantics<arbitrary>, #tpu.dimension_semantics<arbitrary>], iteration_bounds = array<i64: 2, 2, 2>, scalar_prefetch = 0 : i64, scratch_operands = 3 : i64, tpu.core_type = #tpu.core_type<tc>, window_params = [{transform_indices = @transform_0, window_bounds = array<i64: 1, 128, 128>}, {transform_indices = @transform_1, window_bounds = array<i64: 1, 1, 128>}, {transform_indices = @transform_2, window_bounds = array<i64: 1, 8, 128>}]} {
    %c0_i32 = arith.constant 0 : i32
    %0 = arith.cmpi eq, %arg1, %c0_i32 : i32
    %c0_i32_0 = arith.constant 0 : i32
    %1 = arith.cmpi eq, %arg2, %c0_i32_0 : i32
    %2 = arith.andi %0, %1 : i1
    %3 = arith.extui %2 : i1 to i32
    %c0_i32_1 = arith.constant 0 : i32
    %4 = arith.cmpi ne, %3, %c0_i32_1 : i32
    scf.if %4 {
      %cst_28 = arith.constant 0.000000e+00 : f32
      %51 = vector.broadcast %cst_28 : f32 to vector<1x8x128xf32>
      %c0_29 = arith.constant 0 : index
      %c0_30 = arith.constant 0 : index
      %c0_31 = arith.constant 0 : index
      %52 = vector.load %arg5[%c0_29, %c0_30, %c0_31] : memref<1x8x128xf32, #tpu.memory_space<vmem>>, vector<1x8x128xf32>
      tpu.vector_store %arg5[%c0_29, %c0_30, %c0_31], %51 {strides = array<i32>} : memref<1x8x128xf32, #tpu.memory_space<vmem>>, vector<1x8x128xf32>,
    } else {
    }
    %c0_i32_2 = arith.constant 0 : i32
    %5 = arith.cmpi eq, %arg2, %c0_i32_2 : i32
    %6 = arith.extui %5 : i1 to i32
    %c0_i32_3 = arith.constant 0 : i32
    %7 = arith.cmpi ne, %6, %c0_i32_3 : i32
    scf.if %7 {
      %cst_28 = arith.constant 0xFF800000 : f32
      %51 = vector.broadcast %cst_28 : f32 to vector<1x128xf32>
      %c0_29 = arith.constant 0 : index
      %c0_30 = arith.constant 0 : index
      %52 = vector.load %arg6[%c0_29, %c0_30] : memref<1x128xf32, #tpu.memory_space<vmem>>, vector<1x128xf32>
      tpu.vector_store %arg6[%c0_29, %c0_30], %51 {strides = array<i32>} : memref<1x128xf32, #tpu.memory_space<vmem>>, vector<1x128xf32>,
      %cst_31 = arith.constant 0.000000e+00 : f32
      %53 = vector.broadcast %cst_31 : f32 to vector<1x128xf32>
      %c0_32 = arith.constant 0 : index
      %c0_33 = arith.constant 0 : index
      %54 = vector.load %arg7[%c0_32, %c0_33] : memref<1x128xf32, #tpu.memory_space<vmem>>, vector<1x128xf32>
      tpu.vector_store %arg7[%c0_32, %c0_33], %53 {strides = array<i32>} : memref<1x128xf32, #tpu.memory_space<vmem>>, vector<1x128xf32>,
      %cst_34 = arith.constant 0.000000e+00 : f32
      %55 = vector.broadcast %cst_34 : f32 to vector<1x128xf32>
      %c0_35 = arith.constant 0 : index
      %c0_36 = arith.constant 0 : index
      %56 = vector.load %arg8[%c0_35, %c0_36] : memref<1x128xf32, #tpu.memory_space<vmem>>, vector<1x128xf32>
      tpu.vector_store %arg8[%c0_35, %c0_36], %55 {strides = array<i32>} : memref<1x128xf32, #tpu.memory_space<vmem>>, vector<1x128xf32>,
    } else {
    }
    %c0 = arith.constant 0 : index
    %c0_4 = arith.constant 0 : index
    %c0_5 = arith.constant 0 : index
    %8 = vector.load %arg3[%c0, %c0_4, %c0_5] : memref<1x128x128xf32, #tpu.memory_space<vmem>>, vector<1x128x128xf32>
    %9 = vector.shape_cast %8 : vector<1x128x128xf32> to vector<128x128xf32>
    %c0_6 = arith.constant 0 : index
    %c0_7 = arith.constant 0 : index
    %c0_8 = arith.constant 0 : index
    %10 = vector.load %arg4[%c0_6, %c0_7, %c0_8] : memref<1x1x128xi32, #tpu.memory_space<vmem>>, vector<1x1x128xi32>
    %11 = vector.shape_cast %10 : vector<1x1x128xi32> to vector<1x128xi32>
    %12 = tpu.iota {dimensions = array<i32: 0>} : vector<128x128xi32>
    %c128_i32 = arith.constant 128 : i32
    %13 = arith.muli %arg2, %c128_i32 : i32
    %14 = vector.broadcast %13 : i32 to vector<128x128xi32>
    %15 = arith.addi %14, %12 : vector<128x128xi32>
    %c200_i32 = arith.constant 200 : i32
    %16 = vector.broadcast %c200_i32 : i32 to vector<128x128xi32>
    %17 = arith.cmpi slt, %15, %16 : vector<128x128xi32>
    %cst = arith.constant 0xFF800000 : f32
    %18 = vector.broadcast %cst : f32 to vector<128x128xf32>
    %19 = arith.select %17, %9, %18 : vector<128x128xi1>, vector<128x128xf32>
    %cst_9 = arith.constant dense<0xFF800000> : vector<128xf32>
    %20 = vector.multi_reduction <maximumf>, %19, %cst_9 [0] : vector<128x128xf32> to vector<128xf32>
    %21 = vector.shape_cast %20 : vector<128xf32> to vector<1x128xf32>
    %c0_10 = arith.constant 0 : index
    %c0_11 = arith.constant 0 : index
    %22 = vector.load %arg6[%c0_10, %c0_11] : memref<1x128xf32, #tpu.memory_space<vmem>>, vector<1x128xf32>
    %23 = arith.maximumf %22, %21 : vector<1x128xf32>
    %24 = vector.broadcast %23 : vector<1x128xf32> to vector<128x128xf32>
    %25 = arith.subf %19, %24 : vector<128x128xf32>
    %26 = math.exp %25 : vector<128x128xf32>
    %c128_i32_12 = arith.constant 128 : i32
    %27 = arith.muli %arg2, %c128_i32_12 : i32
    %28 = vector.broadcast %27 : i32 to vector<1x128xi32>
    %29 = arith.subi %11, %28 : vector<1x128xi32>
    %30 = vector.broadcast %29 : vector<1x128xi32> to vector<128x128xi32>
    %31 = arith.cmpi eq, %12, %30 : vector<128x128xi32>
    %c0_i32_13 = arith.constant 0 : i32
    %32 = arith.sitofp %c0_i32_13 : i32 to f32
    %33 = vector.broadcast %32 : f32 to vector<128x128xf32>
    %34 = arith.select %31, %19, %33 : vector<128x128xi1>, vector<128x128xf32>
    %cst_14 = arith.constant 1.000000e+00 : f32
    %35 = vector.broadcast %cst_14 : f32 to vector<1x128xf32>
    %cst_15 = arith.constant dense<0.000000e+00> : vector<1x128xf32>
    %36 = tpu.matmul %35, %26, %cst_15 {dimension_numbers = #tpu.dot_dimension_numbers<[1], [0], [0], [1], [0, 0, 1, 1], [], []>} : vector<1x128xf32>, vector<128x128xf32>, vector<1x128xf32> -> vector<1x128xf32>
    %cst_16 = arith.constant dense<0.000000e+00> : vector<1x128xf32>
    %37 = tpu.matmul %35, %34, %cst_16 {dimension_numbers = #tpu.dot_dimension_numbers<[1], [0], [0], [1], [0, 0, 1, 1], [], []>} : vector<1x128xf32>, vector<128x128xf32>, vector<1x128xf32> -> vector<1x128xf32>
    %38 = arith.subf %22, %23 : vector<1x128xf32>
    %39 = math.exp %38 : vector<1x128xf32>
    %c0_17 = arith.constant 0 : index
    %c0_18 = arith.constant 0 : index
    %40 = vector.load %arg7[%c0_17, %c0_18] : memref<1x128xf32, #tpu.memory_space<vmem>>, vector<1x128xf32>
    %41 = arith.mulf %39, %40 : vector<1x128xf32>
    %42 = arith.addf %41, %36 : vector<1x128xf32>
    %c0_19 = arith.constant 0 : index
    %c0_20 = arith.constant 0 : index
    %43 = vector.load %arg7[%c0_19, %c0_20] : memref<1x128xf32, #tpu.memory_space<vmem>>, vector<1x128xf32>
    tpu.vector_store %arg7[%c0_19, %c0_20], %42 {strides = array<i32>} : memref<1x128xf32, #tpu.memory_space<vmem>>, vector<1x128xf32>,
    %c0_21 = arith.constant 0 : index
    %c0_22 = arith.constant 0 : index
    %44 = vector.load %arg8[%c0_21, %c0_22] : memref<1x128xf32, #tpu.memory_space<vmem>>, vector<1x128xf32>
    %45 = arith.addf %44, %37 : vector<1x128xf32>
    %c0_23 = arith.constant 0 : index
    %c0_24 = arith.constant 0 : index
    %46 = vector.load %arg8[%c0_23, %c0_24] : memref<1x128xf32, #tpu.memory_space<vmem>>, vector<1x128xf32>
    tpu.vector_store %arg8[%c0_23, %c0_24], %45 {strides = array<i32>} : memref<1x128xf32, #tpu.memory_space<vmem>>, vector<1x128xf32>,
    %c0_25 = arith.constant 0 : index
    %c0_26 = arith.constant 0 : index
    %47 = vector.load %arg6[%c0_25, %c0_26] : memref<1x128xf32, #tpu.memory_space<vmem>>, vector<1x128xf32>
    tpu.vector_store %arg6[%c0_25, %c0_26], %23 {strides = array<i32>} : memref<1x128xf32, #tpu.memory_space<vmem>>, vector<1x128xf32>,
    %c1_i32 = arith.constant 1 : i32
    %48 = arith.cmpi eq, %arg2, %c1_i32 : i32
    %49 = arith.extui %48 : i1 to i32
    %c0_i32_27 = arith.constant 0 : i32
    %50 = arith.cmpi ne, %49, %c0_i32_27 : i32
    scf.if %50 {
      %c128_i32_28 = arith.constant 128 : i32
      %51 = arith.muli %arg1, %c128_i32_28 : i32
      %52 = tpu.iota {dimensions = array<i32: 1>} : vector<1x128xi32>
      %53 = vector.broadcast %51 : i32 to vector<1x128xi32>
      %54 = arith.addi %53, %52 : vector<1x128xi32>
      %c0_i32_29 = arith.constant 0 : i32
      %55 = vector.broadcast %c0_i32_29 : i32 to vector<1x128xi32>
      %56 = arith.cmpi ne, %11, %55 : vector<1x128xi32>
      %c130_i32 = arith.constant 130 : i32
      %57 = vector.broadcast %c130_i32 : i32 to vector<1x128xi32>
      %58 = arith.cmpi slt, %54, %57 : vector<1x128xi32>
      %59 = arith.andi %56, %58 : vector<1x128xi1>
      %c0_30 = arith.constant 0 : index
      %c0_31 = arith.constant 0 : index
      %60 = vector.load %arg6[%c0_30, %c0_31] : memref<1x128xf32, #tpu.memory_space<vmem>>, vector<1x128xf32>
      %c0_32 = arith.constant 0 : index
      %c0_33 = arith.constant 0 : index
      %61 = vector.load %arg7[%c0_32, %c0_33] : memref<1x128xf32, #tpu.memory_space<vmem>>, vector<1x128xf32>
      %62 = math.log %61 : vector<1x128xf32>
      %63 = arith.addf %60, %62 : vector<1x128xf32>
      %c0_34 = arith.constant 0 : index
      %c0_35 = arith.constant 0 : index
      %64 = vector.load %arg8[%c0_34, %c0_35] : memref<1x128xf32, #tpu.memory_space<vmem>>, vector<1x128xf32>
      %65 = arith.subf %63, %64 : vector<1x128xf32>
      %cst_36 = arith.constant 0.000000e+00 : f32
      %66 = vector.broadcast %cst_36 : f32 to vector<1x128xf32>
      %67 = arith.select %59, %65, %66 : vector<1x128xi1>, vector<1x128xf32>
      %c0_37 = arith.constant 0 : index
      %c0_38 = arith.constant 0 : index
      %68 = vector.load %arg8[%c0_37, %c0_38] : memref<1x128xf32, #tpu.memory_space<vmem>>, vector<1x128xf32>
      %69 = arith.cmpf oge, %68, %60 : vector<1x128xf32>
      %70 = arith.andi %59, %69 : vector<1x128xi1>
      %cst_39 = arith.constant 1.000000e+00 : f32
      %cst_40 = arith.constant 0.000000e+00 : f32
      %71 = vector.broadcast %cst_39 : f32 to vector<1x128xf32>
      %72 = vector.broadcast %cst_40 : f32 to vector<1x128xf32>
      %73 = arith.select %70, %71, %72 : vector<1x128xi1>, vector<1x128xf32>
      %cst_41 = arith.constant dense<0.000000e+00> : vector<1xf32>
      %74 = vector.multi_reduction <add>, %67, %cst_41 [1] : vector<1x128xf32> to vector<1xf32>
      %75 = vector.shape_cast %74 : vector<1xf32> to vector<1x1xf32>
      %cst_42 = arith.constant dense<0.000000e+00> : vector<1xf32>
      %76 = vector.multi_reduction <add>, %73, %cst_42 [1] : vector<1x128xf32> to vector<1xf32>
      %77 = vector.shape_cast %76 : vector<1xf32> to vector<1x1xf32>
      %78 = arith.extui %59 : vector<1x128xi1> to vector<1x128xi32>
      %79 = arith.sitofp %78 : vector<1x128xi32> to vector<1x128xf32>
      %cst_43 = arith.constant dense<0.000000e+00> : vector<1xf32>
      %80 = vector.multi_reduction <add>, %79, %cst_43 [1] : vector<1x128xf32> to vector<1xf32>
      %81 = vector.shape_cast %80 : vector<1xf32> to vector<1x1xf32>
      %82 = tpu.iota {dimensions = array<i32: 0>} : vector<8x128xi32>
      %83 = tpu.iota {dimensions = array<i32: 1>} : vector<8x128xi32>
      %c0_i32_44 = arith.constant 0 : i32
      %84 = vector.broadcast %c0_i32_44 : i32 to vector<8x128xi32>
      %85 = arith.cmpi eq, %82, %84 : vector<8x128xi32>
      %c0_i32_45 = arith.constant 0 : i32
      %86 = vector.broadcast %c0_i32_45 : i32 to vector<8x128xi32>
      %87 = arith.cmpi eq, %83, %86 : vector<8x128xi32>
      %88 = arith.andi %85, %87 : vector<8x128xi1>
      %cst_46 = arith.constant 0.000000e+00 : f32
      %89 = vector.shape_cast %75 : vector<1x1xf32> to vector<1x1xf32>
      %90 = vector.broadcast %89 : vector<1x1xf32> to vector<8x128xf32>
      %91 = vector.broadcast %cst_46 : f32 to vector<8x128xf32>
      %92 = arith.select %88, %90, %91 : vector<8x128xi1>, vector<8x128xf32>
      %c0_i32_47 = arith.constant 0 : i32
      %93 = vector.broadcast %c0_i32_47 : i32 to vector<8x128xi32>
      %94 = arith.cmpi eq, %82, %93 : vector<8x128xi32>
      %c1_i32_48 = arith.constant 1 : i32
      %95 = vector.broadcast %c1_i32_48 : i32 to vector<8x128xi32>
      %96 = arith.cmpi eq, %83, %95 : vector<8x128xi32>
      %97 = arith.andi %94, %96 : vector<8x128xi1>
      %cst_49 = arith.constant 0.000000e+00 : f32
      %98 = vector.shape_cast %77 : vector<1x1xf32> to vector<1x1xf32>
      %99 = vector.broadcast %98 : vector<1x1xf32> to vector<8x128xf32>
      %100 = vector.broadcast %cst_49 : f32 to vector<8x128xf32>
      %101 = arith.select %97, %99, %100 : vector<8x128xi1>, vector<8x128xf32>
      %102 = arith.addf %92, %101 : vector<8x128xf32>
      %c0_i32_50 = arith.constant 0 : i32
      %103 = vector.broadcast %c0_i32_50 : i32 to vector<8x128xi32>
      %104 = arith.cmpi eq, %82, %103 : vector<8x128xi32>
      %c2_i32 = arith.constant 2 : i32
      %105 = vector.broadcast %c2_i32 : i32 to vector<8x128xi32>
      %106 = arith.cmpi eq, %83, %105 : vector<8x128xi32>
      %107 = arith.andi %104, %106 : vector<8x128xi1>
      %cst_51 = arith.constant 0.000000e+00 : f32
      %108 = vector.shape_cast %81 : vector<1x1xf32> to vector<1x1xf32>
      %109 = vector.broadcast %108 : vector<1x1xf32> to vector<8x128xf32>
      %110 = vector.broadcast %cst_51 : f32 to vector<8x128xf32>
      %111 = arith.select %107, %109, %110 : vector<8x128xi1>, vector<8x128xf32>
      %112 = arith.addf %102, %111 : vector<8x128xf32>
      %c0_52 = arith.constant 0 : index
      %c0_53 = arith.constant 0 : index
      %c0_54 = arith.constant 0 : index
      %113 = vector.load %arg5[%c0_52, %c0_53, %c0_54] : memref<1x8x128xf32, #tpu.memory_space<vmem>>, vector<1x8x128xf32>
      %114 = vector.shape_cast %113 : vector<1x8x128xf32> to vector<8x128xf32>
      %115 = arith.addf %114, %112 : vector<8x128xf32>
      %c0_55 = arith.constant 0 : index
      %c0_56 = arith.constant 0 : index
      %c0_57 = arith.constant 0 : index
      %116 = vector.load %arg5[%c0_55, %c0_56, %c0_57] : memref<1x8x128xf32, #tpu.memory_space<vmem>>, vector<1x8x128xf32>
      %117 = vector.shape_cast %116 : vector<1x8x128xf32> to vector<8x128xf32>
      %118 = vector.shape_cast %115 : vector<8x128xf32> to vector<1x8x128xf32>
      tpu.vector_store %arg5[%c0_55, %c0_56, %c0_57], %118 {strides = array<i32>} : memref<1x8x128xf32, #tpu.memory_space<vmem>>, vector<1x8x128xf32>,
    } else {
    }
    return
  }
  func.func @transform_0(%arg0: i32, %arg1: i32, %arg2: i32) -> (i32, i32, i32) {
    %c0_i32 = arith.constant 0 : i32
    return %arg0, %arg2, %arg1 : i32, i32, i32
  }
  func.func @transform_1(%arg0: i32, %arg1: i32, %arg2: i32) -> (i32, i32, i32) {
    %c0_i32 = arith.constant 0 : i32
    %c0_i32_0 = arith.constant 0 : i32
    return %arg0, %c0_i32, %arg1 : i32, i32, i32
  }
  func.func @transform_2(%arg0: i32, %arg1: i32, %arg2: i32) -> (i32, i32, i32) {
    %c0_i32 = arith.constant 0 : i32
    %c0_i32_0 = arith.constant 0 : i32
    %c0_i32_1 = arith.constant 0 : i32
    return %arg0, %c0_i32, %c0_i32_0 : i32, i32, i32
  }
}

</mosaic_0001>

<llo_original>
// kernel: tpu_custom_call.1
$region0: #{tpu_custom_call.1}
  #allocation0 [shape = 'u32[]', space=smem, size = 0x4, offset = 0x4, fixed_abs, tag = 'smem constant byte address 0x4 - core index']
  #allocation1 [shape = 'u32[144,128]{1,0:T(1,128)}', space=vmem, size = 0x12000, scoped, tag = 'internal scratch']
  #allocation2 [shape = 'f32[1,128]{1,0:T(1,128)}', space=vmem, size = 0x200, scoped, tag = 'scratch operand']
  #allocation3 [shape = 'f32[1,128]{1,0:T(1,128)}', space=vmem, size = 0x200, scoped, tag = 'scratch operand']
  #allocation4 [shape = 'f32[1,128]{1,0:T(1,128)}', space=vmem, size = 0x200, scoped, tag = 'scratch operand']
  %s0 = inlined_call_operand.vmem [shape: f32[2,200,130], index: 0, kind: input, shape index: {}]
  %s1 = inlined_call_operand.vmem [shape: s32[2,1,130], index: 1, kind: input, shape index: {}]
  %s2 = inlined_call_operand.hbm [shape: f32[2,8,128], index: 2, kind: output, shape index: {}]
  %s3 = sld [smem:[#allocation0]]
  $region105: #{tpu_custom_call.1} parent=0
    _
  %s5 = ssub.s32 1, %s3
  %s6 = scalar_select 0, %s5, %s3
  $region1: #{tpu_custom_call.1} parent=0
    #allocation5 [shape = 'u8[131072]{0}', space=vmem, size = 0x20000, scoped, tag = 'input window, operand 0']
    #allocation6 [shape = 'u8[8192]{0}', space=vmem, size = 0x2000, scoped, tag = 'output window, operand 0']
    #allocation7 [shape = 's32[2]{0}', space=sflag, size = 0x8, scoped, tag = 'scoped memory for tpu_custom_call.1']
    %7 = vsyncpa [#allocation7], 0
    %s8 = scalar_lea.sflag [#allocation7], 1
    %9 = vsyncpa %s8, 0
    loop: start=0, step=1, limit=10
    $region2: #{tpu_custom_call.1} parent=1 // loop_pre_header
      _
    $region3: #{tpu_custom_call.1} parent=1 // loop_header
      %s11 = sphi 0, %s15
      %p12 = scmp.ge.s32.totalorder %s11, 10
      %s18 = sphi 0, %s37
      %s19 = sphi 0, %s33
      %s20 = sphi 0, %s29
      %s21 = sphi 0, %s18
      %s22 = sphi 0, %s19
      %s23 = sphi 0, %s20
      %s24 = sphi 0, %s21
      %s25 = sphi 0, %s22
      %s26 = sphi 0, %s23
      %s44 = sphi 0, %s46
      %s47 = sphi 0, %s44
      %s48 = sphi 0, %s47
      %s64 = sphi 0, %s48
      %s72 = sphi 0, %s74
      %s75 = sphi 0, %s72
      %s76 = sphi 0, %s75
      %s92 = sphi 0, %s76
      %s98 = sphi 0, %s100
      %s101 = sphi 0, %s98
      %s102 = sphi 0, %s101
      %s118 = sphi 0, %s102
    $region4: #{tpu_custom_call.1} parent=1 // loop_header_branch
      %14 = sbr.rel (%p12) target = $region8
    $region5: #{tpu_custom_call.1} parent=1 // loop_body
      %s16 = ssub.s32 %s11, 1
      %s17 = ssub.s32 %s11, 2
      %s27 = sadd.s32 1, %s20
      %p28 = scmp.ge.s32.totalorder %s27, 2
      %s29 = scalar_select %p28, 0, %s27
      %s30 = sadd.s32 1, %s19
      %s31 = scalar_select %p28, %s30, %s19
      %p32 = scmp.ge.s32.totalorder %s31, 2
      %s33 = scalar_select %p32, 0, %s31
      %s34 = sadd.s32 1, %s18
      %s35 = scalar_select %p32, %s34, %s18
      %p36 = scmp.ge.s32.totalorder %s35, 2
      %s37 = scalar_select %p36, 0, %s35
      %s38 = ssub.s32 %s18, %s37
      %s39 = ssub.s32 %s20, %s29
      %s40 = sor.u32 %s38, %s39
      %s41 = ssub.s32 %s19, %s33
      %s42 = sor.u32 %s40, %s41
      %p43 = scmp.eq.s32.totalorder %s42, 0
      %s45 = sadd.s32 %s44, 1
      %s46 = scalar_select %p43, %s44, %s45
      %p49 = pneg %p43
      %p50 = scmp.eq.s32.totalorder %s11, 7
      %p51 = por %p49, %p50
      %p52 = scmp.ne.s32.totalorder %s44, %s47
      %p53 = scmp.eq.s32.totalorder %s11, 0
      %p54 = por %p52, %p53
      %p55 = scmp.ne.s32.totalorder %s44, %s47
      %p56 = scmp.eq.s32.totalorder %s16, 7
      %p57 = por %p55, %p56
      %p58 = scmp.ne.s32.totalorder %s47, %s48
      %p59 = scmp.eq.s32.totalorder %s16, 0
      %p60 = por %p58, %p59
      %p61 = scmp.ne.s32.totalorder %s47, %s48
      %p62 = scmp.eq.s32.totalorder %s17, 7
      %p63 = por %p61, %p62
      %p65 = scmp.ne.s32.totalorder %s48, %s64
      %p66 = scmp.eq.s32.totalorder %s17, 0
      %p67 = por %p65, %p66
      %s68 = ssub.s32 %s18, %s37
      %s69 = ssub.s32 %s19, %s33
      %s70 = sor.u32 %s68, %s69
      %p71 = scmp.eq.s32.totalorder %s70, 0
      %s73 = sadd.s32 %s72, 1
      %s74 = scalar_select %p71, %s72, %s73
      %p77 = pneg %p71
      %p78 = scmp.eq.s32.totalorder %s11, 7
      %p79 = por %p77, %p78
      %p80 = scmp.ne.s32.totalorder %s72, %s75
      %p81 = scmp.eq.s32.totalorder %s11, 0
      %p82 = por %p80, %p81
      %p83 = scmp.ne.s32.totalorder %s72, %s75
      %p84 = scmp.eq.s32.totalorder %s16, 7
      %p85 = por %p83, %p84
      %p86 = scmp.ne.s32.totalorder %s75, %s76
      %p87 = scmp.eq.s32.totalorder %s16, 0
      %p88 = por %p86, %p87
      %p89 = scmp.ne.s32.totalorder %s75, %s76
      %p90 = scmp.eq.s32.totalorder %s17, 7
      %p91 = por %p89, %p90
      %p93 = scmp.ne.s32.totalorder %s76, %s92
      %p94 = scmp.eq.s32.totalorder %s17, 0
      %p95 = por %p93, %p94
      %s96 = ssub.s32 %s18, %s37
      %p97 = scmp.eq.s32.totalorder %s96, 0
      %s99 = sadd.s32 %s98, 1
      %s100 = scalar_select %p97, %s98, %s99
      %p103 = pneg %p97
      %p104 = scmp.eq.s32.totalorder %s11, 7
      %p105 = por %p103, %p104
      %p106 = scmp.ne.s32.totalorder %s98, %s101
      %p107 = scmp.eq.s32.totalorder %s11, 0
      %p108 = por %p106, %p107
      %p109 = scmp.ne.s32.totalorder %s98, %s101
      %p110 = scmp.eq.s32.totalorder %s16, 7
      %p111 = por %p109, %p110
      %p112 = scmp.ne.s32.totalorder %s101, %s102
      %p113 = scmp.eq.s32.totalorder %s16, 0
      %p114 = por %p112, %p113
      %p115 = scmp.ne.s32.totalorder %s101, %s102
      %p116 = scmp.eq.s32.totalorder %s17, 7
      %p117 = por %p115, %p116
      %p119 = scmp.ne.s32.totalorder %s102, %s118
      %p120 = scmp.eq.s32.totalorder %s17, 0
      %p121 = por %p119, %p120
      %p122 = scmp.le.s32.totalorder 1, %s11
      %p123 = scmp.lt.s32.totalorder %s11, 9
      %p124 = pnand %p122, %p123
      %p125 = pneg %p124
      // Predicated region
      $region9: #{tpu_custom_call.1} parent=5 // pred_check
        _
      $region10: #{tpu_custom_call.1} parent=5 // pred_check_branch
        %127 = sbr.rel (%p124) target = $region12
      $region11: #{tpu_custom_call.1} parent=5 // pred_region
        %s128 = ssub.s32 %s11, 1
      $region12: #{tpu_custom_call.1} parent=5 // pred_fallthru
        _
      %p129 = scmp.lt.s32.totalorder %s11, 8
      // Predicated region
      $region13: #{tpu_custom_call.1} parent=5 // pred_check
        %p130 = pneg %p129
      $region14: #{tpu_custom_call.1} parent=5 // pred_check_branch
        %132 = sbr.rel (%p130) target = $region16
      $region15: #{tpu_custom_call.1} parent=5 // pred_region
        // Predicated region
        $region17: #{tpu_custom_call.1} parent=15 // pred_check
          %p133 = pneg %p54
        $region18: #{tpu_custom_call.1} parent=15 // pred_check_branch
          %135 = sbr.rel (%p133) target = $region20
        $region19: #{tpu_custom_call.1} parent=15 // pred_region
          %s136 = sand.u32 %s44, 1
          %s137 = sand.u32 %s44, 1
          %s138 = smul.addr %s137, 128
          %s139 = scalar_lea.vmem [#allocation5], %s138
          %s140 = smul.u32 16, %s20
          %s141 = ssub.s32 25, %s140
          %p142 = scmp.lt.s32.totalorder %s141, 16
          %s143 = scalar_select %p142, %s141, 16
          %s144 = smul.u32 128, %s143
          %p145 = scmp.ne.s32.totalorder 0, %s144
          %s146 = smul.addr %s140, 2
          %s147 = sadd.s32 %s19, %s146
          %s148 = smul.addr %s18, 50
          %s149 = sadd.s32 %s147, %s148
          %s150 = smul.addr %s149, 8
          %s151 = scalar_lea.vmem %s0, %s150
          // Predicated region
          $region21: #{tpu_custom_call.1} parent=19 // pred_check
            %p152 = pneg %p145
          $region22: #{tpu_custom_call.1} parent=19 // pred_check_branch
            %154 = sbr.rel (%p152) target = $region24
          $region23: #{tpu_custom_call.1} parent=19 // pred_region
            // Predicated region
            $region25: #{tpu_custom_call.1} parent=23 // pred_check
              _
            $region26: #{tpu_custom_call.1} parent=23 // pred_check_branch
              %156 = sbr.rel (0) target = $region28
            $region27: #{tpu_custom_call.1} parent=23 // pred_region
              // Predicated region
              $region47: #{tpu_custom_call.1} parent=27 // pred_check
                _
              $region48: #{tpu_custom_call.1} parent=27 // pred_check_branch
                %235 = sbr.rel (0) target = $region50
              $region49: #{tpu_custom_call.1} parent=27 // pred_region
                %s236 = sshrl.u32 %s143, 4
                // While loop
                $region51: #{tpu_custom_call.1} parent=49 // loop_pre_header
                  _
                $region52: #{tpu_custom_call.1} parent=49 // loop_header
                  %s238 = sphi 0, %s240
                  %p239 = scmp.ge.s32.totalorder %s238, %s236
                  %s243 = sphi 0, %s280
                  %s244 = sphi %s151, %s283
                  %s245 = sphi %s139, %s284
                $region53: #{tpu_custom_call.1} parent=49 // loop_header_branch
                  %242 = sbr.rel (%p239) target = $region57
                $region54: #{tpu_custom_call.1} parent=49 // loop_body
                  %v246 = vld [vmem:[%s244] sm:$0xff]
                  %247 = vst [vmem:[%s245] sm:$0xff] %v246
                  %v248 = vld [vmem:[%s244 + $0x10] sm:$0xff]
                  %249 = vst [vmem:[%s245 + $0x8] sm:$0xff] %v248
                  %v250 = vld [vmem:[%s244 + $0x20] sm:$0xff]
                  %251 = vst [vmem:[%s245 + $0x10] sm:$0xff] %v250
                  %v252 = vld [vmem:[%s244 + $0x30] sm:$0xff]
                  %253 = vst [vmem:[%s245 + $0x18] sm:$0xff] %v252
                  %v254 = vld [vmem:[%s244 + $0x40] sm:$0xff]
                  %255 = vst [vmem:[%s245 + $0x20] sm:$0xff] %v254
                  %v256 = vld [vmem:[%s244 + $0x50] sm:$0xff]
                  %257 = vst [vmem:[%s245 + $0x28] sm:$0xff] %v256
                  %v258 = vld [vmem:[%s244 + $0x60] sm:$0xff]
                  %259 = vst [vmem:[%s245 + $0x30] sm:$0xff] %v258
                  %v260 = vld [vmem:[%s244 + $0x70] sm:$0xff]
                  %261 = vst [vmem:[%s245 + $0x38] sm:$0xff] %v260
                  %v262 = vld [vmem:[%s244 + $0x80] sm:$0xff]
                  %263 = vst [vmem:[%s245 + $0x40] sm:$0xff] %v262
                  %v264 = vld [vmem:[%s244 + $0x90] sm:$0xff]
                  %265 = vst [vmem:[%s245 + $0x48] sm:$0xff] %v264
                  %v266 = vld [vmem:[%s244 + $0xa0] sm:$0xff]
                  %267 = vst [vmem:[%s245 + $0x50] sm:$0xff] %v266
                  %v268 = vld [vmem:[%s244 + $0xb0] sm:$0xff]
                  %269 = vst [vmem:[%s245 + $0x58] sm:$0xff] %v268
                  %v270 = vld [vmem:[%s244 + $0xc0] sm:$0xff]
                  %271 = vst [vmem:[%s245 + $0x60] sm:$0xff] %v270
                  %v272 = vld [vmem:[%s244 + $0xd0] sm:$0xff]
                  %273 = vst [vmem:[%s245 + $0x68] sm:$0xff] %v272
                  %v274 = vld [vmem:[%s244 + $0xe0] sm:$0xff]
                  %275 = vst [vmem:[%s245 + $0x70] sm:$0xff] %v274
                  %v276 = vld [vmem:[%s244 + $0xf0] sm:$0xff]
                  %277 = vst [vmem:[%s245 + $0x78] sm:$0xff] %v276
                  %s278 = sadd.s32 1, %s243
                  %p279 = scmp.ge.s32.totalorder %s278, %s236
                  %s280 = scalar_select %p279, 0, %s278
                  %s281 = smul.u32 %s280, 256
                  %s282 = smul.u32 %s280, 128
                  %s283 = scalar_lea.vmem %s151, %s281
                  %s284 = scalar_lea.vmem %s139, %s282 [#allocation5]
                $region55: #{tpu_custom_call.1} parent=49 // loop_footer
                  %s240 = sadd.s32 %s238, 1
                $region56: #{tpu_custom_call.1} parent=49 // loop_footer_branch
                  %237 = sbr.rel target = $region52
                $region57: #{tpu_custom_call.1} parent=49 // loop_exit
                  _
                %s285 = sshrl.u32 %s143, 4
                %s286 = sand.u32 %s143, 15
                %s287 = smul.u32 %s285, 16
                %s288 = smul.u32 16, %s287
                %s289 = scalar_lea.vmem %s151, %s288
                %s290 = smul.u32 8, %s287
                %s291 = scalar_lea.vmem %s139, %s290 [#allocation5]
                // While loop
                $region58: #{tpu_custom_call.1} parent=49 // loop_pre_header
                  _
                $region59: #{tpu_custom_call.1} parent=49 // loop_header
                  %s293 = sphi 0, %s295
                  %p294 = scmp.ge.s32.totalorder %s293, %s286
                  %s298 = sphi 0, %s305
                  %s299 = sphi %s289, %s308
                  %s300 = sphi %s291, %s309
                $region60: #{tpu_custom_call.1} parent=49 // loop_header_branch
                  %297 = sbr.rel (%p294) target = $region64
                $region61: #{tpu_custom_call.1} parent=49 // loop_body
                  %v301 = vld [vmem:[%s299] sm:$0xff]
                  %302 = vst [vmem:[%s300] sm:$0xff] %v301
                  %s303 = sadd.s32 1, %s298
                  %p304 = scmp.ge.s32.totalorder %s303, %s286
                  %s305 = scalar_select %p304, 0, %s303
                  %s306 = smul.u32 %s305, 16
                  %s307 = smul.u32 %s305, 8
                  %s308 = scalar_lea.vmem %s289, %s306
                  %s309 = scalar_lea.vmem %s291, %s307 [#allocation5]
                $region62: #{tpu_custom_call.1} parent=49 // loop_footer
                  %s295 = sadd.s32 %s293, 1
                $region63: #{tpu_custom_call.1} parent=49 // loop_footer_branch
                  %292 = sbr.rel target = $region59
                $region64: #{tpu_custom_call.1} parent=49 // loop_exit
                  _
              $region50: #{tpu_custom_call.1} parent=27 // pred_fallthru
                _
              // Predicated region
              $region65: #{tpu_custom_call.1} parent=27 // pred_check
                _
              $region66: #{tpu_custom_call.1} parent=27 // pred_check_branch
                %311 = sbr.rel target = $region68
              $region67: #{tpu_custom_call.1} parent=27 // pred_region
                _
              $region68: #{tpu_custom_call.1} parent=27 // pred_fallthru
                _
            $region28: #{tpu_custom_call.1} parent=23 // pred_fallthru
              _
            // Predicated region
            $region29: #{tpu_custom_call.1} parent=23 // pred_check
              _
            $region30: #{tpu_custom_call.1} parent=23 // pred_check_branch
              %158 = sbr.rel target = $region32
            $region31: #{tpu_custom_call.1} parent=23 // pred_region
              %s160 = sshrl.u32 %s143, 4
              // While loop
              $region33: #{tpu_custom_call.1} parent=31 // loop_pre_header
                _
              $region34: #{tpu_custom_call.1} parent=31 // loop_header
                %s162 = sphi 0, %s164
                %p163 = scmp.ge.s32.totalorder %s162, %s160
                %s167 = sphi 0, %s204
                %s168 = sphi %s151, %s207
                %s169 = sphi %s139, %s208
              $region35: #{tpu_custom_call.1} parent=31 // loop_header_branch
                %166 = sbr.rel (%p163) target = $region39
              $region36: #{tpu_custom_call.1} parent=31 // loop_body
                %v170 = vld [vmem:[%s168] sm:$0xff]
                %171 = vst [vmem:[%s169] sm:$0xff] %v170
                %v172 = vld [vmem:[%s168 + $0x10] sm:$0xff]
                %173 = vst [vmem:[%s169 + $0x8] sm:$0xff] %v172
                %v174 = vld [vmem:[%s168 + $0x20] sm:$0xff]
                %175 = vst [vmem:[%s169 + $0x10] sm:$0xff] %v174
                %v176 = vld [vmem:[%s168 + $0x30] sm:$0xff]
                %177 = vst [vmem:[%s169 + $0x18] sm:$0xff] %v176
                %v178 = vld [vmem:[%s168 + $0x40] sm:$0xff]
                %179 = vst [vmem:[%s169 + $0x20] sm:$0xff] %v178
                %v180 = vld [vmem:[%s168 + $0x50] sm:$0xff]
                %181 = vst [vmem:[%s169 + $0x28] sm:$0xff] %v180
                %v182 = vld [vmem:[%s168 + $0x60] sm:$0xff]
                %183 = vst [vmem:[%s169 + $0x30] sm:$0xff] %v182
                %v184 = vld [vmem:[%s168 + $0x70] sm:$0xff]
                %185 = vst [vmem:[%s169 + $0x38] sm:$0xff] %v184
                %v186 = vld [vmem:[%s168 + $0x80] sm:$0xff]
                %187 = vst [vmem:[%s169 + $0x40] sm:$0xff] %v186
                %v188 = vld [vmem:[%s168 + $0x90] sm:$0xff]
                %189 = vst [vmem:[%s169 + $0x48] sm:$0xff] %v188
                %v190 = vld [vmem:[%s168 + $0xa0] sm:$0xff]
                %191 = vst [vmem:[%s169 + $0x50] sm:$0xff] %v190
                %v192 = vld [vmem:[%s168 + $0xb0] sm:$0xff]
                %193 = vst [vmem:[%s169 + $0x58] sm:$0xff] %v192
                %v194 = vld [vmem:[%s168 + $0xc0] sm:$0xff]
                %195 = vst [vmem:[%s169 + $0x60] sm:$0xff] %v194
                %v196 = vld [vmem:[%s168 + $0xd0] sm:$0xff]
                %197 = vst [vmem:[%s169 + $0x68] sm:$0xff] %v196
                %v198 = vld [vmem:[%s168 + $0xe0] sm:$0xff]
                %199 = vst [vmem:[%s169 + $0x70] sm:$0xff] %v198
                %v200 = vld [vmem:[%s168 + $0xf0] sm:$0xff]
                %201 = vst [vmem:[%s169 + $0x78] sm:$0xff] %v200
                %s202 = sadd.s32 1, %s167
                %p203 = scmp.ge.s32.totalorder %s202, %s160
                %s204 = scalar_select %p203, 0, %s202
                %s205 = smul.u32 %s204, 256
                %s206 = smul.u32 %s204, 128
                %s207 = scalar_lea.vmem %s151, %s205
                %s208 = scalar_lea.vmem %s139, %s206 [#allocation5]
              $region37: #{tpu_custom_call.1} parent=31 // loop_footer
                %s164 = sadd.s32 %s162, 1
              $region38: #{tpu_custom_call.1} parent=31 // loop_footer_branch
                %161 = sbr.rel target = $region34
              $region39: #{tpu_custom_call.1} parent=31 // loop_exit
                _
              %s209 = sshrl.u32 %s143, 4
              %s210 = sand.u32 %s143, 15
              %s211 = smul.u32 %s209, 16
              %s212 = smul.u32 16, %s211
              %s213 = scalar_lea.vmem %s151, %s212
              %s214 = smul.u32 8, %s211
              %s215 = scalar_lea.vmem %s139, %s214 [#allocation5]
              // While loop
              $region40: #{tpu_custom_call.1} parent=31 // loop_pre_header
                _
              $region41: #{tpu_custom_call.1} parent=31 // loop_header
                %s217 = sphi 0, %s219
                %p218 = scmp.ge.s32.totalorder %s217, %s210
                %s222 = sphi 0, %s229
                %s223 = sphi %s213, %s232
                %s224 = sphi %s215, %s233
              $region42: #{tpu_custom_call.1} parent=31 // loop_header_branch
                %221 = sbr.rel (%p218) target = $region46
              $region43: #{tpu_custom_call.1} parent=31 // loop_body
                %v225 = vld [vmem:[%s223] sm:$0xff]
                %226 = vst [vmem:[%s224] sm:$0xff] %v225
                %s227 = sadd.s32 1, %s222
                %p228 = scmp.ge.s32.totalorder %s227, %s210
                %s229 = scalar_select %p228, 0, %s227
                %s230 = smul.u32 %s229, 16
                %s231 = smul.u32 %s229, 8
                %s232 = scalar_lea.vmem %s213, %s230
                %s233 = scalar_lea.vmem %s215, %s231 [#allocation5]
              $region44: #{tpu_custom_call.1} parent=31 // loop_footer
                %s219 = sadd.s32 %s217, 1
              $region45: #{tpu_custom_call.1} parent=31 // loop_footer_branch
                %216 = sbr.rel target = $region41
              $region46: #{tpu_custom_call.1} parent=31 // loop_exit
                _
            $region32: #{tpu_custom_call.1} parent=23 // pred_fallthru
              _
          $region24: #{tpu_custom_call.1} parent=19 // pred_fallthru
            _
          %312 = vnop
        $region20: #{tpu_custom_call.1} parent=15 // pred_fallthru
          _
        // Predicated region
        $region69: #{tpu_custom_call.1} parent=15 // pred_check
          %p313 = pneg %p82
        $region70: #{tpu_custom_call.1} parent=15 // pred_check_branch
          %315 = sbr.rel (%p313) target = $region72
        $region71: #{tpu_custom_call.1} parent=15 // pred_region
          %p316 = scmp.lt.s32.totalorder %s18, 1
          %s317 = scalar_select %p316, %s18, 1
          %p318 = scmp.lt.s32.totalorder %s19, 1
          %s319 = scalar_select %p318, %s19, 1
          %s320 = smul.addr %s317, 2
          %s321 = sadd.s32 %s319, %s320
          %s322 = scalar_lea.vmem %s1, %s321
        $region72: #{tpu_custom_call.1} parent=15 // pred_fallthru
          _
      $region16: #{tpu_custom_call.1} parent=5 // pred_fallthru
        _
      %p323 = scmp.le.s32.totalorder 1, %s11
      %p324 = scmp.lt.s32.totalorder %s11, 9
      %p325 = pnand %p323, %p324
      %p326 = pneg %p325
      // Predicated region
      $region73: #{tpu_custom_call.1} parent=5 // pred_check
        _
      $region74: #{tpu_custom_call.1} parent=5 // pred_check_branch
        %328 = sbr.rel (%p325) target = $region76
      $region75: #{tpu_custom_call.1} parent=5 // pred_region
        %s329 = ssub.s32 %s11, 1
        %s330 = sand.u32 %s47, 1
        %s331 = sand.u32 %s47, 1
        %s332 = smul.addr %s331, 128
        %s333 = scalar_lea.vmem [#allocation5], %s332
        // Predicated region
        $region77: #{tpu_custom_call.1} parent=75 // pred_check
          %p334 = pneg %p60
        $region78: #{tpu_custom_call.1} parent=75 // pred_check_branch
          %336 = sbr.rel (%p334) target = $region80
        $region79: #{tpu_custom_call.1} parent=75 // pred_region
          _
        $region80: #{tpu_custom_call.1} parent=75 // pred_fallthru
          _
        %s337 = sand.u32 %s47, 1
        %s338 = sand.u32 %s47, 1
        %s339 = smul.addr %s338, 128
        %s340 = scalar_lea.vmem [#allocation5], %s339
        %p341 = pneg %p60
        %p342 = pneg %p57
        %p343 = scmp.lt.s32.totalorder %s21, 1
        %s344 = scalar_select %p343, %s21, 1
        %p345 = scmp.lt.s32.totalorder %s22, 1
        %s346 = scalar_select %p345, %s22, 1
        %s347 = smul.addr %s344, 2
        %s348 = sadd.s32 %s346, %s347
        %s349 = scalar_lea.vmem %s1, %s348
        %p350 = pneg %p88
        %p351 = pneg %p85
        %p352 = pneg %p114
        %p353 = pneg %p111
        %s354 = sand.u32 %s101, 1
        %s355 = scalar_lea.sflag [#allocation7], %s354
        %s356 = sand.u32 %s101, 1
        %s357 = smul.addr %s356, 8
        %s358 = scalar_lea.vmem [#allocation6], %s357
        %s359 = smul.u32 16, %s23
        %s360 = ssub.s32 25, %s359
        %p361 = scmp.lt.s32.totalorder %s360, 16
        %s362 = scalar_select %p361, %s360, 16
        %s363 = smul.u32 128, %s362
        %p364 = scmp.lt.s32.totalorder %s21, 1
        %s365 = scalar_select %p364, %s21, 1
        %p366 = scmp.lt.s32.totalorder %s22, 1
        %s367 = scalar_select %p366, %s22, 1
        %s368 = smul.addr %s365, 2
        %s369 = sadd.s32 %s367, %s368
        %s370 = scalar_lea.vmem %s1, %s369
        %p371 = scmp.eq.s32.totalorder %s22, 0
        %p372 = scmp.eq.s32.totalorder %s23, 0
        %p373 = pnand %p371, %p372
        %p374 = pneg %p373
        // Predicated region
        $region81: #{tpu_custom_call.1} parent=75 // pred_check
          _
        $region82: #{tpu_custom_call.1} parent=75 // pred_check_branch
          %376 = sbr.rel (%p373) target = $region84
        $region83: #{tpu_custom_call.1} parent=75 // pred_region
          %377 = vst [vmem:[%s358] sm:$0xff] 0.0
        $region84: #{tpu_custom_call.1} parent=75 // pred_fallthru
          _
        // Predicated region
        $region85: #{tpu_custom_call.1} parent=75 // pred_check
          %p378 = pneg %p372
        $region86: #{tpu_custom_call.1} parent=75 // pred_check_branch
          %380 = sbr.rel (%p378) target = $region88
        $region87: #{tpu_custom_call.1} parent=75 // pred_region
          %381 = vst [vmem:[#allocation2] sm:$0x1] -inf
          %382 = vst [vmem:[#allocation3] sm:$0x1] 0.0
          %383 = vst [vmem:[#allocation4] sm:$0x1] 0.0
        $region88: #{tpu_custom_call.1} parent=75 // pred_fallthru
          _
        %v384 = vld [vmem:[%s333] sm:$0xff]
        %v385 = vld [vmem:[%s333 + $0x8] sm:$0xff]
        %v386 = vld [vmem:[%s333 + $0x10] sm:$0xff]
        %v387 = vld [vmem:[%s333 + $0x18] sm:$0xff]
        %v388 = vld [vmem:[%s333 + $0x20] sm:$0xff]
        %v389 = vld [vmem:[%s333 + $0x28] sm:$0xff]
        %v390 = vld [vmem:[%s333 + $0x30] sm:$0xff]
        %v391 = vld [vmem:[%s333 + $0x38] sm:$0xff]
        %v392 = vld [vmem:[%s333 + $0x40] sm:$0xff]
        %v393 = vld [vmem:[%s333 + $0x48] sm:$0xff]
        %v394 = vld [vmem:[%s333 + $0x50] sm:$0xff]
        %v395 = vld [vmem:[%s333 + $0x58] sm:$0xff]
        %v396 = vld [vmem:[%s333 + $0x60] sm:$0xff]
        %v397 = vld [vmem:[%s333 + $0x68] sm:$0xff]
        %v398 = vld [vmem:[%s333 + $0x70] sm:$0xff]
        %v399 = vld [vmem:[%s333 + $0x78] sm:$0xff]
        %v400 = vld [vmem:[%s370] sm:$0x1]
        %v401 = vlaneseq
        %v402 = vshrl.u32 %v401, 7
        %v403 = vadd.s32 %v402, 8
        %v404 = vadd.s32 %v402, 16
        %v405 = vadd.s32 %v402, 24
        %v406 = vadd.s32 %v402, 32
        %v407 = vadd.s32 %v402, 40
        %v408 = vadd.s32 %v402, 48
        %v409 = vadd.s32 %v402, 56
        %v410 = vadd.s32 %v402, 64
        %v411 = vadd.s32 %v402, 72
        %v412 = vadd.s32 %v402, 80
        %v413 = vadd.s32 %v402, 88
        %v414 = vadd.s32 %v402, 96
        %v415 = vadd.s32 %v402, 104
        %v416 = vadd.s32 %v402, 112
        %v417 = vadd.s32 %v402, 120
        %s418 = smul.u32 %s23, 128
        %v419 = vstv %s418
        %v420 = vadd.s32 %v419, %v402
        %v421 = vadd.s32 %v419, %v403
        %v422 = vadd.s32 %v419, %v404
        %v423 = vadd.s32 %v419, %v405
        %v424 = vadd.s32 %v419, %v406
        %v425 = vadd.s32 %v419, %v407
        %v426 = vadd.s32 %v419, %v408
        %v427 = vadd.s32 %v419, %v409
        %v428 = vadd.s32 %v419, %v410
        %v429 = vadd.s32 %v419, %v411
        %v430 = vadd.s32 %v419, %v412
        %v431 = vadd.s32 %v419, %v413
        %v432 = vadd.s32 %v419, %v414
        %v433 = vadd.s32 %v419, %v415
        %v434 = vadd.s32 %v419, %v416
        %v435 = vadd.s32 %v419, %v417
        %vm436 = vcmp.lt.s32.totalorder %v420, 200
        %vm437 = vcmp.lt.s32.totalorder %v421, 200
        %vm438 = vcmp.lt.s32.totalorder %v422, 200
        %vm439 = vcmp.lt.s32.totalorder %v423, 200
        %vm440 = vcmp.lt.s32.totalorder %v424, 200
        %vm441 = vcmp.lt.s32.totalorder %v425, 200
        %vm442 = vcmp.lt.s32.totalorder %v426, 200
        %vm443 = vcmp.lt.s32.totalorder %v427, 200
        %vm444 = vcmp.lt.s32.totalorder %v428, 200
        %vm445 = vcmp.lt.s32.totalorder %v429, 200
        %vm446 = vcmp.lt.s32.totalorder %v430, 200
        %vm447 = vcmp.lt.s32.totalorder %v431, 200
        %vm448 = vcmp.lt.s32.totalorder %v432, 200
        %vm449 = vcmp.lt.s32.totalorder %v433, 200
        %vm450 = vcmp.lt.s32.totalorder %v434, 200
        %vm451 = vcmp.lt.s32.totalorder %v435, 200
        %v452 = vsel %vm436, %v384, -inf
        %v453 = vsel %vm437, %v385, -inf
        %v454 = vsel %vm438, %v386, -inf
        %v455 = vsel %vm439, %v387, -inf
        %v456 = vsel %vm440, %v388, -inf
        %v457 = vsel %vm441, %v389, -inf
        %v458 = vsel %vm442, %v390, -inf
        %v459 = vsel %vm443, %v391, -inf
        %v460 = vsel %vm444, %v392, -inf
        %v461 = vsel %vm445, %v393, -inf
        %v462 = vsel %vm446, %v394, -inf
        %v463 = vsel %vm447, %v395, -inf
        %v464 = vsel %vm448, %v396, -inf
        %v465 = vsel %vm449, %v397, -inf
        %v466 = vsel %vm450, %v398, -inf
        %v467 = vsel %vm451, %v399, -inf
        %v468 = vmax.f32 %v452, %v456
        %v469 = vmax.f32 %v453, %v457
        %v470 = vmax.f32 %v454, %v458
        %v471 = vmax.f32 %v455, %v459
        %v472 = vmax.f32 %v468, %v460
        %v473 = vmax.f32 %v469, %v461
        %v474 = vmax.f32 %v470, %v462
        %v475 = vmax.f32 %v471, %v463
        %v476 = vmax.f32 %v472, %v464
        %v477 = vmax.f32 %v473, %v465
        %v478 = vmax.f32 %v474, %v466
        %v479 = vmax.f32 %v475, %v467
        %v480 = vmax.f32 %v476, %v477
        %v481 = vmax.f32 %v478, %v479
        %v482 = vmax.f32 %v480, %v481
        %v483 = vrot.slane %v482, 4
        %v484 = vmax.f32 %v482, %v483
        %v485 = vrot.slane %v484, 2
        %v486 = vmax.f32 %v484, %v485
        %v487 = vrot.slane %v486, 1
        %v488 = vmax.f32 %v486, %v487
        %v489 = vld [vmem:[#allocation2] sm:$0x1]
        %v490 = vmax.f32 %v489, %v488
        %v492 = vlaneseq
        %v493 = vshrl.u32 %v492, 7
        %v494 = vsub.s32 0, %v493
        %v495 = vrot.slane %v490, %v494
        %v497 = vsub.f32 %v452, %v495
        %v498 = vsub.f32 %v453, %v495
        %v499 = vsub.f32 %v454, %v495
        %v500 = vsub.f32 %v455, %v495
        %v501 = vsub.f32 %v456, %v495
        %v502 = vsub.f32 %v457, %v495
        %v503 = vsub.f32 %v458, %v495
        %v504 = vsub.f32 %v459, %v495
        %v505 = vsub.f32 %v460, %v495
        %v506 = vsub.f32 %v461, %v495
        %v507 = vsub.f32 %v462, %v495
        %v508 = vsub.f32 %v463, %v495
        %v509 = vsub.f32 %v464, %v495
        %v510 = vsub.f32 %v465, %v495
        %v511 = vsub.f32 %v466, %v495
        %v512 = vsub.f32 %v467, %v495
        %v513 = vmul.f32 %v497, 1.442695
        %v514 = vpow.pop %v513
        %v515 = vmul.f32 %v498, 1.442695
        %v516 = vpow.pop %v515
        %v517 = vmul.f32 %v499, 1.442695
        %v518 = vpow.pop %v517
        %v519 = vmul.f32 %v500, 1.442695
        %v520 = vpow.pop %v519
        %v521 = vmul.f32 %v501, 1.442695
        %v522 = vpow.pop %v521
        %v523 = vmul.f32 %v502, 1.442695
        %v524 = vpow.pop %v523
        %v525 = vmul.f32 %v503, 1.442695
        %v526 = vpow.pop %v525
        %v527 = vmul.f32 %v504, 1.442695
        %v528 = vpow.pop %v527
        %v529 = vmul.f32 %v505, 1.442695
        %v530 = vpow.pop %v529
        %v531 = vmul.f32 %v506, 1.442695
        %v532 = vpow.pop %v531
        %v533 = vmul.f32 %v507, 1.442695
        %v534 = vpow.pop %v533
        %v535 = vmul.f32 %v508, 1.442695
        %v536 = vpow.pop %v535
        %v537 = vmul.f32 %v509, 1.442695
        %v538 = vpow.pop %v537
        %v539 = vmul.f32 %v510, 1.442695
        %v540 = vpow.pop %v539
        %v541 = vmul.f32 %v511, 1.442695
        %v542 = vpow.pop %v541
        %v543 = vmul.f32 %v512, 1.442695
        %v544 = vpow.pop %v543
        %v545 = vsub.s32 %v400, %v419
        %v546 = vlaneseq
        %v547 = vshrl.u32 %v546, 7
        %v548 = vsub.s32 0, %v547
        %v549 = vrot.slane %v545, %v548
        %vm550 = vcmp.eq.s32.totalorder %v402, %v549
        %vm551 = vcmp.eq.s32.totalorder %v403, %v549
        %vm552 = vcmp.eq.s32.totalorder %v404, %v549
        %vm553 = vcmp.eq.s32.totalorder %v405, %v549
        %vm554 = vcmp.eq.s32.totalorder %v406, %v549
        %vm555 = vcmp.eq.s32.totalorder %v407, %v549
        %vm556 = vcmp.eq.s32.totalorder %v408, %v549
        %vm557 = vcmp.eq.s32.totalorder %v409, %v549
        %vm558 = vcmp.eq.s32.totalorder %v410, %v549
        %vm559 = vcmp.eq.s32.totalorder %v411, %v549
        %vm560 = vcmp.eq.s32.totalorder %v412, %v549
        %vm561 = vcmp.eq.s32.totalorder %v413, %v549
        %vm562 = vcmp.eq.s32.totalorder %v414, %v549
        %vm563 = vcmp.eq.s32.totalorder %v415, %v549
        %vm564 = vcmp.eq.s32.totalorder %v416, %v549
        %vm565 = vcmp.eq.s32.totalorder %v417, %v549
        %v566 = vsel %vm550, %v452, 0.0
        %v567 = vsel %vm551, %v453, 0.0
        %v568 = vsel %vm552, %v454, 0.0
        %v569 = vsel %vm553, %v455, 0.0
        %v570 = vsel %vm554, %v456, 0.0
        %v571 = vsel %vm555, %v457, 0.0
        %v572 = vsel %vm556, %v458, 0.0
        %v573 = vsel %vm557, %v459, 0.0
        %v574 = vsel %vm558, %v460, 0.0
        %v575 = vsel %vm559, %v461, 0.0
        %v576 = vsel %vm560, %v462, 0.0
        %v577 = vsel %vm561, %v463, 0.0
        %v578 = vsel %vm562, %v464, 0.0
        %v579 = vsel %vm563, %v465, 0.0
        %v580 = vsel %vm564, %v466, 0.0
        %v581 = vsel %vm565, %v467, 0.0
        %582 = vmatprep.subr.mxu0 0.0
        %583 = vmatpush1.msra.mxu0 %v514
        %584 = vmatprep.subr.mxu0 0.0
        %585 = vmatpush1.msra.mxu0 %v516
        %586 = vmatprep.subr.mxu0 0.0
        %587 = vmatpush1.msra.mxu0 %v518
        %588 = vmatprep.subr.mxu0 0.0
        %589 = vmatpush1.msra.mxu0 %v520
        %590 = vmatprep.subr.mxu0 0.0
        %591 = vmatpush1.msra.mxu0 %v522
        %592 = vmatprep.subr.mxu0 0.0
        %593 = vmatpush1.msra.mxu0 %v524
        %594 = vmatprep.subr.mxu0 0.0
        %595 = vmatpush1.msra.mxu0 %v526
        %596 = vmatprep.subr.mxu0 0.0
        %597 = vmatpush1.msra.mxu0 %v528
        %598 = vmatprep.subr.mxu0 0.0
        %599 = vmatpush1.msra.mxu0 %v530
        %600 = vmatprep.subr.mxu0 0.0
        %601 = vmatpush1.msra.mxu0 %v532
        %602 = vmatprep.subr.mxu0 0.0
        %603 = vmatpush1.msra.mxu0 %v534
        %604 = vmatprep.subr.mxu0 0.0
        %605 = vmatpush1.msra.mxu0 %v536
        %606 = vmatprep.subr.mxu0 0.0
        %607 = vmatpush1.msra.mxu0 %v538
        %608 = vmatprep.subr.mxu0 0.0
        %609 = vmatpush1.msra.mxu0 %v540
        %610 = vmatprep.subr.mxu0 0.0
        %611 = vmatpush1.msra.mxu0 %v542
        %612 = vmatprep.subr.mxu0 0.0
        %613 = vmatpush1.msra.mxu0 %v544
        %614 = vmatprep.subr.mxu0 0.0
        %615 = vmatpush1.msra.mxu0 0.0
        %616 = vmatprep.subr.mxu0 0.0
        %617 = vmatpush1.msra.mxu0 0.0
        %618 = vmatprep.subr.mxu0 0.0
        %619 = vmatpush1.msra.mxu0 0.0
        %620 = vmatprep.subr.mxu0 0.0
        %621 = vmatpush1.msra.mxu0 0.0
        %622 = vmatprep.subr.mxu0 0.0
        %623 = vmatpush1.msra.mxu0 0.0
        %624 = vmatprep.subr.mxu0 0.0
        %625 = vmatpush1.msra.mxu0 0.0
        %626 = vmatprep.subr.mxu0 0.0
        %627 = vmatpush1.msra.mxu0 0.0
        %628 = vmatprep.subr.mxu0 0.0
        %629 = vmatpush1.msra.mxu0 0.0
        %630 = vmatprep.subr.mxu0 0.0
        %631 = vmatpush1.msra.mxu0 0.0
        %632 = vmatprep.subr.mxu0 0.0
        %633 = vmatpush1.msra.mxu0 0.0
        %634 = vmatprep.subr.mxu0 0.0
        %635 = vmatpush1.msra.mxu0 0.0
        %636 = vmatprep.subr.mxu0 0.0
        %637 = vmatpush1.msra.mxu0 0.0
        %638 = vmatprep.subr.mxu0 0.0
        %639 = vmatpush1.msra.mxu0 0.0
        %640 = vmatprep.subr.mxu0 0.0
        %641 = vmatpush1.msra.mxu0 0.0
        %642 = vmatprep.subr.mxu0 0.0
        %643 = vmatpush1.msra.mxu0 0.0
        %644 = vmatprep.subr.mxu0 0.0
        %645 = vmatpush1.msra.mxu0 0.0
        %646 = vmatprep.mubr.f32.mxu0 0.0
        %647 = vmatmul.mubr.f32.gmra.mrb[0].mxu0 1.0
        %v648 = vpop.f32.mrb[0].mxu0
        %v649 = vadd.f32 0.0, %v648
        %v650 = vpop.f32.mrb[0].mxu0
        %651 = vdwg.mxu0
        %652 = vmatprep.subr.mxu0 0.0
        %653 = vmatpush1.msra.mxu0 %v566
        %654 = vmatprep.subr.mxu0 0.0
        %655 = vmatpush1.msra.mxu0 %v567
        %656 = vmatprep.subr.mxu0 0.0
        %657 = vmatpush1.msra.mxu0 %v568
        %658 = vmatprep.subr.mxu0 0.0
        %659 = vmatpush1.msra.mxu0 %v569
        %660 = vmatprep.subr.mxu0 0.0
        %661 = vmatpush1.msra.mxu0 %v570
        %662 = vmatprep.subr.mxu0 0.0
        %663 = vmatpush1.msra.mxu0 %v571
        %664 = vmatprep.subr.mxu0 0.0
        %665 = vmatpush1.msra.mxu0 %v572
        %666 = vmatprep.subr.mxu0 0.0
        %667 = vmatpush1.msra.mxu0 %v573
        %668 = vmatprep.subr.mxu0 0.0
        %669 = vmatpush1.msra.mxu0 %v574
        %670 = vmatprep.subr.mxu0 0.0
        %671 = vmatpush1.msra.mxu0 %v575
        %672 = vmatprep.subr.mxu0 0.0
        %673 = vmatpush1.msra.mxu0 %v576
        %674 = vmatprep.subr.mxu0 0.0
        %675 = vmatpush1.msra.mxu0 %v577
        %676 = vmatprep.subr.mxu0 0.0
        %677 = vmatpush1.msra.mxu0 %v578
        %678 = vmatprep.subr.mxu0 0.0
        %679 = vmatpush1.msra.mxu0 %v579
        %680 = vmatprep.subr.mxu0 0.0
        %681 = vmatpush1.msra.mxu0 %v580
        %682 = vmatprep.subr.mxu0 0.0
        %683 = vmatpush1.msra.mxu0 %v581
        %684 = vmatprep.subr.mxu0 0.0
        %685 = vmatpush1.msra.mxu0 0.0
        %686 = vmatprep.subr.mxu0 0.0
        %687 = vmatpush1.msra.mxu0 0.0
        %688 = vmatprep.subr.mxu0 0.0
        %689 = vmatpush1.msra.mxu0 0.0
        %690 = vmatprep.subr.mxu0 0.0
        %691 = vmatpush1.msra.mxu0 0.0
        %692 = vmatprep.subr.mxu0 0.0
        %693 = vmatpush1.msra.mxu0 0.0
        %694 = vmatprep.subr.mxu0 0.0
        %695 = vmatpush1.msra.mxu0 0.0
        %696 = vmatprep.subr.mxu0 0.0
        %697 = vmatpush1.msra.mxu0 0.0
        %698 = vmatprep.subr.mxu0 0.0
        %699 = vmatpush1.msra.mxu0 0.0
        %700 = vmatprep.subr.mxu0 0.0
        %701 = vmatpush1.msra.mxu0 0.0
        %702 = vmatprep.subr.mxu0 0.0
        %703 = vmatpush1.msra.mxu0 0.0
        %704 = vmatprep.subr.mxu0 0.0
        %705 = vmatpush1.msra.mxu0 0.0
        %706 = vmatprep.subr.mxu0 0.0
        %707 = vmatpush1.msra.mxu0 0.0
        %708 = vmatprep.subr.mxu0 0.0
        %709 = vmatpush1.msra.mxu0 0.0
        %710 = vmatprep.subr.mxu0 0.0
        %711 = vmatpush1.msra.mxu0 0.0
        %712 = vmatprep.subr.mxu0 0.0
        %713 = vmatpush1.msra.mxu0 0.0
        %714 = vmatprep.subr.mxu0 0.0
        %715 = vmatpush1.msra.mxu0 0.0
        %716 = vmatprep.mubr.f32.mxu0 0.0
        %717 = vmatmul.mubr.f32.gmra.mrb[0].mxu0 1.0
        %v718 = vpop.f32.mrb[0].mxu0
        %v719 = vadd.f32 0.0, %v718
        %v720 = vpop.f32.mrb[0].mxu0
        %721 = vdwg.mxu0
        %v722 = vsub.f32 %v489, %v490
        %v723 = vmul.f32 %v722, 1.442695
        %v724 = vpow.pop %v723
        %v725 = vld [vmem:[#allocation3] sm:$0x1]
        %v726 = vmul.f32 %v724, %v725
        %v727 = vadd.f32 %v726, %v649
        %728 = vst [vmem:[#allocation3] sm:$0x1] %v727
        %v729 = vld [vmem:[#allocation4] sm:$0x1]
        %v730 = vadd.f32 %v729, %v719
        %731 = vst [vmem:[#allocation4] sm:$0x1] %v730
        %732 = vst [vmem:[#allocation2] sm:$0x1] %v490
        %p733 = scmp.eq.s32.totalorder %s23, 1
        // Predicated region
        $region89: #{tpu_custom_call.1} parent=75 // pred_check
          %p734 = pneg %p733
        $region90: #{tpu_custom_call.1} parent=75 // pred_check_branch
          %736 = sbr.rel (%p734) target = $region92
        $region91: #{tpu_custom_call.1} parent=75 // pred_region
          %s737 = smul.u32 %s22, 128
          %v738 = vlaneseq
          %v739 = vand.u32 %v738, 127
          %v740 = vstv %s737
          %v741 = vadd.s32 %v740, %v739
          %vm742 = vcmp.ne.s32.totalorder %v400, 0
          %vm743 = vcmp.lt.s32.totalorder %v741, 130
          %vm744 = vmand %vm742, %vm743
          %v745 = vld [vmem:[#allocation2] sm:$0x1]
          %v746 = vld [vmem:[#allocation3] sm:$0x1]
          %v747 = vlog2.pop %v746
          %v748 = vmul.f32 %v747, 0.6931472
          %v749 = vadd.f32 %v745, %v748
          %v750 = vld [vmem:[#allocation4] sm:$0x1]
          %v751 = vsub.f32 %v749, %v750
          %v752 = vsel %vm744, %v751, 0.0
          %vm753 = vcmp.ge.f32.partialorder %v750, %v745
          %vm754 = vmand %vm744, %vm753
          %v755 = vsel %vm754, 1.0, 0.0
          %vm756 = vcmask 1040384
          %v757 = vsel %vm756, %v752, 0.0
          %758 = vadd.xlane.f32.xlu0 %v757
          %v759 = vpop.xlane.xlu0 %758
          %v760 = vsel %vm756, %v755, 0.0
          %761 = vadd.xlane.f32.xlu0 %v760
          %v762 = vpop.xlane.xlu0 %761
          %v763 = vsel %vm744, 1, 0
          %v764 = vcvt.s32.f32 %v763
          %v765 = vsel %vm756, %v764, 0.0
          %766 = vadd.xlane.f32.xlu0 %v765
          %v767 = vpop.xlane.xlu0 %766
          %vm768 = vcmp.eq.s32.totalorder %v402, 0
          %vm769 = vcmp.eq.s32.totalorder %v739, 0
          %vm770 = vmand %vm768, %vm769
          %v771 = vlaneseq
          %v772 = vshrl.u32 %v771, 7
          %v773 = vsub.s32 0, %v772
          %v774 = vrot.slane %v759, %v773
          %v775 = vsel %vm770, %v774, 0.0
          %vm776 = vcmp.eq.s32.totalorder %v739, 1
          %vm777 = vmand %vm768, %vm776
          %v778 = vlaneseq
          %v779 = vshrl.u32 %v778, 7
          %v780 = vsub.s32 0, %v779
          %v781 = vrot.slane %v762, %v780
          %v782 = vsel %vm777, %v781, 0.0
          %v783 = vadd.f32 %v775, %v782
          %vm784 = vcmp.eq.s32.totalorder %v739, 2
          %vm785 = vmand %vm768, %vm784
          %v786 = vlaneseq
          %v787 = vshrl.u32 %v786, 7
          %v788 = vsub.s32 0, %v787
          %v789 = vrot.slane %v767, %v788
          %v790 = vsel %vm785, %v789, 0.0
          %v791 = vadd.f32 %v783, %v790
          %v792 = vld [vmem:[%s358] sm:$0xff]
          %v793 = vadd.f32 %v792, %v791
          %794 = vst [vmem:[%s358] sm:$0xff] %v793
        $region92: #{tpu_custom_call.1} parent=75 // pred_fallthru
          _
        %s795 = sand.u32 %s101, 1
        %s796 = scalar_lea.sflag [#allocation7], %s795
        %s797 = sand.u32 %s101, 1
        %s798 = smul.addr %s797, 8
        %s799 = scalar_lea.vmem [#allocation6], %s798
        // Predicated region
        $region93: #{tpu_custom_call.1} parent=75 // pred_check
          %p800 = pneg %p111
        $region94: #{tpu_custom_call.1} parent=75 // pred_check_branch
          %802 = sbr.rel (%p800) target = $region96
        $region95: #{tpu_custom_call.1} parent=75 // pred_region
          %s804 = ssub.s32 128, 128
          %805 = vsyncadd %s796, %s804
          %s806 = smul.addr %s21, 128
          %s807 = scalar_lea.hbm %s2, %s806
          %s809 = sshll.u32 %s799, 4
          %s810 = int_to_ptr.vmem [resolvable:$true] %s809
          %812 = dma.vmem_to_hbm [thread:$0]  %s810, 128, %s807, %s796
        $region96: #{tpu_custom_call.1} parent=75 // pred_fallthru
          _
      $region76: #{tpu_custom_call.1} parent=5 // pred_fallthru
        _
      %p813 = scmp.le.s32.totalorder 2, %s11
      // Predicated region
      $region97: #{tpu_custom_call.1} parent=5 // pred_check
        %p814 = pneg %p813
      $region98: #{tpu_custom_call.1} parent=5 // pred_check_branch
        %816 = sbr.rel (%p814) target = $region100
      $region99: #{tpu_custom_call.1} parent=5 // pred_region
        %s817 = ssub.s32 %s11, 2
        // Predicated region
        $region101: #{tpu_custom_call.1} parent=99 // pred_check
          %p818 = pneg %p117
        $region102: #{tpu_custom_call.1} parent=99 // pred_check_branch
          %820 = sbr.rel (%p818) target = $region104
        $region103: #{tpu_custom_call.1} parent=99 // pred_region
          %s821 = sand.u32 %s102, 1
          %s822 = scalar_lea.sflag [#allocation7], %s821
          %s823 = sand.u32 %s102, 1
          %s824 = smul.addr %s823, 8
          %s825 = scalar_lea.vmem [#allocation6], %s824
          %826 = dma.done %s822, 128
        $region104: #{tpu_custom_call.1} parent=99 // pred_fallthru
          _
      $region100: #{tpu_custom_call.1} parent=5 // pred_fallthru
        _
    $region6: #{tpu_custom_call.1} parent=1 // loop_footer
      %s15 = sadd.s32 1, %s11
    $region7: #{tpu_custom_call.1} parent=1 // loop_footer_branch
      %10 = sbr.rel target = $region3
    $region8: #{tpu_custom_call.1} parent=1 // loop_exit
      _
    %827 = vsyncpa [#allocation7], 1
    %s828 = scalar_lea.sflag [#allocation7], 1
    %829 = vsyncpa %s828, 1

</llo_original>
